<compile_context>
chip_gen: v6e
topology: v6e:2x2x1
jax: 0.10.0
libtpu: 0.0.40
codegen_flags: <defaults>
</compile_context>

<pallas_src>
import functools
import math

import numpy as np
import jax
import jax.numpy as jnp
from jax import lax
from jax.experimental import pallas as pl
from jax.experimental.pallas import tpu as pltpu

_LN_EPS = 1e-5  # PyTorch nn.LayerNorm default


def _layernorm(v, gamma, beta):
    # v: (R, E); gamma/beta: (1, E); all f32
    mu = jnp.mean(v, axis=-1, keepdims=True)
    vc = v - mu
    var = jnp.mean(vc * vc, axis=-1, keepdims=True)
    return vc * lax.rsqrt(var + _LN_EPS) * gamma + beta


def _transformer_layer_kernel(x_ref, wcat_ref, w2_ref, vec_ref, o_ref, *,
                              nhead, batch):
    N, E = x_ref.shape            # N = seq_len * batch (seq-major rows)
    Wd = w2_ref.shape[0]          # feed-forward width
    H = nhead
    Dh = E // H
    B = batch

    f32 = jnp.float32
    bf16 = jnp.bfloat16

    # ---- unpack packed parameter slabs (static lane slices) ---------------
    w_in = wcat_ref[:, 0:3 * E]             # (E, 3E)  bf16, q-scale folded in
    w_o = wcat_ref[:, 3 * E:4 * E]          # (E, E)
    w_1 = wcat_ref[:, 4 * E:4 * E + Wd]     # (E, Wd)

    ln1_g = vec_ref[:, 0 * E:1 * E]
    ln1_b = vec_ref[:, 1 * E:2 * E]
    ln2_g = vec_ref[:, 2 * E:3 * E]
    ln2_b = vec_ref[:, 3 * E:4 * E]
    b_o = vec_ref[:, 4 * E:5 * E]
    b_2 = vec_ref[:, 5 * E:6 * E]
    b_in = vec_ref[:, 6 * E:9 * E]          # (1, 3E), q part pre-scaled
    b_1 = vec_ref[:, 9 * E:9 * E + Wd]      # (1, Wd)

    x2 = x_ref[...]                          # (N, E) f32

    # ---- LayerNorm 1 (pre-attention) ---------------------------------------
    xn2 = _layernorm(x2, ln1_g, ln1_b)

    # ---- fused QKV projection: one MXU matmul ------------------------------
    qkv = jnp.dot(xn2.astype(bf16), w_in, preferred_element_type=f32) + b_in
    q, k, v = qkv[:, 0:E], qkv[:, E:2 * E], qkv[:, 2 * E:3 * E]

    # split heads along lanes -> (H, N, Dh); single batched einsum over heads
    q3 = jnp.stack([q[:, h * Dh:(h + 1) * Dh] for h in range(H)], axis=0)
    k3 = jnp.stack([k[:, h * Dh:(h + 1) * Dh] for h in range(H)], axis=0)
    v3 = jnp.stack([v[:, h * Dh:(h + 1) * Dh] for h in range(H)], axis=0)

    # scores[h, n, m]; rows n = s*B + b.  Combined causal + same-batch mask,
    # generated in-kernel (float math only -> guaranteed VPU lowering).
    s = jnp.einsum('hnd,hmd->hnm', q3.astype(bf16), k3.astype(bf16),
                   preferred_element_type=f32)          # (H, N, N)
    ni = lax.broadcasted_iota(jnp.int32, (N, N), 0).astype(f32)
    mi = lax.broadcasted_iota(jnp.int32, (N, N), 1).astype(f32)
    d = ni - mi
    allowed = (d >= 0.0) & (jnp.floor(d / B) * B == d)   # causal & same batch
    s = jnp.where(allowed[None, :, :], s, -1e30)

    # online-softmax-style normalization (diagonal is always unmasked, so no
    # fully-masked-row NaN guard is needed for the causal mask).
    m = jnp.max(s, axis=-1, keepdims=True)
    p = jnp.exp(s - m)
    p = p * pl.reciprocal(jnp.sum(p, axis=-1, keepdims=True), approx=True)
    # TODO(synk): attention dropout (p=0.2) omitted - eval/inference semantics.

    ctx = jnp.einsum('hnm,hmd->hnd', p.astype(bf16), v3.astype(bf16),
                     preferred_element_type=f32)         # (H, N, Dh)
    ctx_cat = jnp.concatenate([ctx[h] for h in range(H)], axis=-1)  # (N, E)

    # ---- fused output projection: one MXU matmul ----------------------------
    att2 = jnp.dot(ctx_cat.astype(bf16), w_o, preferred_element_type=f32) + b_o

    # ---- residual 1 + LayerNorm 2 + feed-forward ----------------------------
    y2 = x2 + att2
    yn2 = _layernorm(y2, ln2_g, ln2_b)
    h1 = jnp.maximum(
        jnp.dot(yn2.astype(bf16), w_1, preferred_element_type=f32) + b_1, 0.0)
    ff = jnp.dot(h1.astype(bf16), w2_ref[...], preferred_element_type=f32) + b_2
    # TODO(synk): output dropout (p=0.2) omitted - eval/inference semantics.

    # ---- residual 2 ----------------------------------------------------------
    o_ref[...] = y2 + ff


def transformer_layer_forward(x, attn_mask, params, need_attn_weights=False):
    """x: (S, B, E) float32; attn_mask: (S, S) additive float32 mask.

    Mirrors TransformerLayer.forward (eval mode). Returns (z, attn_weights);
    attn_weights is None (need_weights=False path of nn.MultiheadAttention).
    """
    S, B, E = x.shape
    H = params["nhead"]
    Dh = E // H
    Wd = params["ff_w1"].shape[0]

    in_w = params["in_proj_weight"].astype(jnp.float32)    # (3E, E)
    in_b = params["in_proj_bias"].astype(jnp.float32)      # (3E,)

    # Fold the 1/sqrt(Dh) attention scale into the Q projection (weight+bias).
    scale = jnp.concatenate([jnp.full((E,), 1.0 / math.sqrt(Dh), jnp.float32),
                             jnp.ones((2 * E,), jnp.float32)])
    w_in = in_w.T * scale[None, :]                          # (E, 3E)
    b_in = in_b * scale                                     # (3E,)

    w_o = params["out_proj_weight"].astype(jnp.float32).T   # (E, E)
    w_1 = params["ff_w1"].astype(jnp.float32).T             # (E, Wd)
    w_2 = params["ff_w2"].astype(jnp.float32).T             # (Wd, E)

    # Pack matrices / vectors into few slabs to cut input DMA count (18 -> 4).
    wcat = jnp.concatenate([w_in, w_o, w_1], axis=1).astype(jnp.bfloat16)
    w2_b = w_2.astype(jnp.bfloat16)
    vecs = jnp.concatenate([
        params["norm1_gamma"], params["norm1_beta"],
        params["norm2_gamma"], params["norm2_beta"],
        params["out_proj_bias"], params["ff_b2"],
        b_in, params["ff_b1"],
    ]).astype(jnp.float32).reshape(1, -1)                    # (1, 9E + Wd)

    # Seq-major rows; contiguous reshape only (no transpose, no data movement).
    x2 = x.astype(jnp.float32).reshape(S * B, E)

    # TODO(synk): attn_mask is assumed to be the causal mask (the module calls
    # MultiheadAttention with is_causal=True); the kernel regenerates it
    # in-kernel via iota, so arbitrary non-causal masks are not honored here.
    del attn_mask

    vmem = pl.BlockSpec(memory_space=pltpu.MemorySpace.VMEM)
    kernel = functools.partial(_transformer_layer_kernel, nhead=H, batch=B)
    z2 = pl.pallas_call(
        kernel,
        out_shape=jax.ShapeDtypeStruct((S * B, E), jnp.float32),
        in_specs=[vmem] * 4,
        out_specs=vmem,
        compiler_params=pltpu.CompilerParams(
            # Actual residency is < 0.5 MiB; leave headroom for compiler scratch.
            vmem_limit_bytes=4 * 1024 * 1024),
    )(x2, wcat, w2_b, vecs)

    return z2.reshape(S, B, E), None


def transformer_layer_ref(x, attn_mask, params):
    """Pure-JAX reference with PyTorch semantics (eval mode), all f32."""
    S, B, E = x.shape
    H = params["nhead"]
    Dh = E // H

    def layernorm(v, g, b):
        mu = v.mean(-1, keepdims=True)
        var = ((v - mu) ** 2).mean(-1, keepdims=True)
        return (v - mu) / jnp.sqrt(var + _LN_EPS) * g + b

    in_w, in_b = params["in_proj_weight"], params["in_proj_bias"]
    Wq, Wk, Wv = in_w[:E], in_w[E:2 * E], in_w[2 * E:]
    bq, bk, bv = in_b[:E], in_b[E:2 * E], in_b[2 * E:]

    xn = layernorm(x, params["norm1_gamma"], params["norm1_beta"])
    xn2 = xn.reshape(S * B, E)
    q = (xn2 @ Wq.T + bq).reshape(S, B, H, Dh)
    k = (xn2 @ Wk.T + bk).reshape(S, B, H, Dh)
    v = (xn2 @ Wv.T + bv).reshape(S, B, H, Dh)
    scores = jnp.einsum('sbhd,tbhd->bhst', q, k) / math.sqrt(Dh)
    scores = scores + attn_mask[None, None, :, :]
    attn = jax.nn.softmax(scores, axis=-1)
    ctx = jnp.einsum('bhst,tbhd->sbhd', attn, v).reshape(S, B, E)
    att = (ctx.reshape(S * B, E) @ params["out_proj_weight"].T
           + params["out_proj_bias"]).reshape(S, B, E)
    y = x + att
    yn = layernorm(y, params["norm2_gamma"], params["norm2_beta"])
    h1 = jnp.maximum(yn.reshape(S * B, E) @ params["ff_w1"].T + params["ff_b1"], 0.0)
    ff = (h1 @ params["ff_w2"].T + params["ff_b2"]).reshape(S, B, E)
    return y + ff


if __name__ == "__main__":
    # Small shapes consistent with the module: (seq=8, batch=2, embed=32),
    # nhead=4, feed-forward width=64.
    S, B, E, H, Wd = 8, 2, 32, 4, 64

    key = jax.random.PRNGKey(0)
    ks = jax.random.split(key, 12)

    x = jax.random.normal(ks[0], (S, B, E), dtype=jnp.float32)

    params = {
        "nhead": H,
        "in_proj_weight": jax.random.normal(ks[1], (3 * E, E), jnp.float32) / math.sqrt(E),
        "in_proj_bias": 0.02 * jax.random.normal(ks[2], (3 * E,), jnp.float32),
        "out_proj_weight": jax.random.normal(ks[3], (E, E), jnp.float32) / math.sqrt(E),
        "out_proj_bias": 0.02 * jax.random.normal(ks[4], (E,), jnp.float32),
        "norm1_gamma": 1.0 + 0.05 * jax.random.normal(ks[5], (E,), jnp.float32),
        "norm1_beta": 0.05 * jax.random.normal(ks[6], (E,), jnp.float32),
        "norm2_gamma": 1.0 + 0.05 * jax.random.normal(ks[7], (E,), jnp.float32),
        "norm2_beta": 0.05 * jax.random.normal(ks[8], (E,), jnp.float32),
        "ff_w1": jax.random.normal(ks[9], (Wd, E), jnp.float32) / math.sqrt(E),
        "ff_b1": 0.02 * jax.random.normal(ks[10], (Wd,), jnp.float32),
        "ff_w2": jax.random.normal(ks[11], (E, Wd), jnp.float32) / math.sqrt(Wd),
        "ff_b2": jnp.zeros((E,), jnp.float32),
    }

    # Causal additive mask (what is_causal=True implies in the PyTorch module).
    causal = jnp.tril(jnp.ones((S, S), dtype=bool))
    attn_mask = jnp.where(causal, 0.0, -1e9).astype(jnp.float32)

    z, attn_w = transformer_layer_forward(x, attn_mask, params)
    z = jax.block_until_ready(z)

    z_ref = transformer_layer_ref(x, attn_mask, params)
    # Tolerance sized for bf16 MXU operands with f32 accumulation (plus the
    # approx EUP reciprocal in the softmax); the f32 reference stays exact.
    np.testing.assert_allclose(np.asarray(z), np.asarray(z_ref), rtol=5e-2, atol=5e-2)

    print("KERNEL_OK")
</pallas_src>

<mosaic_0001>
module attributes {stable_mosaic.version = 11 : i64} {
  func.func @_transformer_layer_kernel(%arg0: memref<16x32xf32, #tpu.memory_space<vmem>>, %arg1: memref<32x192xbf16, #tpu.memory_space<vmem>>, %arg2: memref<64x32xbf16, #tpu.memory_space<vmem>>, %arg3: memref<1x352xf32, #tpu.memory_space<vmem>>, %arg4: memref<16x32xf32, #tpu.memory_space<vmem>>) attributes {dimension_semantics = [], scalar_prefetch = 0 : i64, scratch_operands = 0 : i64, tpu.core_type = #tpu.core_type<tc>} {
    %c0 = arith.constant 0 : index
    %c0_0 = arith.constant 0 : index
    %0 = vector.load %arg1[%c0, %c0_0] : memref<32x192xbf16, #tpu.memory_space<vmem>>, vector<32x96xbf16>
    %c0_1 = arith.constant 0 : index
    %c96 = arith.constant 96 : index
    %1 = vector.load %arg1[%c0_1, %c96] : memref<32x192xbf16, #tpu.memory_space<vmem>>, vector<32x32xbf16>
    %c0_2 = arith.constant 0 : index
    %c128 = arith.constant 128 : index
    %2 = vector.load %arg1[%c0_2, %c128] : memref<32x192xbf16, #tpu.memory_space<vmem>>, vector<32x64xbf16>
    %c0_3 = arith.constant 0 : index
    %c0_4 = arith.constant 0 : index
    %3 = vector.load %arg3[%c0_3, %c0_4] : memref<1x352xf32, #tpu.memory_space<vmem>>, vector<1x32xf32>
    %c0_5 = arith.constant 0 : index
    %c32 = arith.constant 32 : index
    %4 = vector.load %arg3[%c0_5, %c32] : memref<1x352xf32, #tpu.memory_space<vmem>>, vector<1x32xf32>
    %c0_6 = arith.constant 0 : index
    %c64 = arith.constant 64 : index
    %5 = vector.load %arg3[%c0_6, %c64] : memref<1x352xf32, #tpu.memory_space<vmem>>, vector<1x32xf32>
    %c0_7 = arith.constant 0 : index
    %c96_8 = arith.constant 96 : index
    %6 = vector.load %arg3[%c0_7, %c96_8] : memref<1x352xf32, #tpu.memory_space<vmem>>, vector<1x32xf32>
    %c0_9 = arith.constant 0 : index
    %c128_10 = arith.constant 128 : index
    %7 = vector.load %arg3[%c0_9, %c128_10] : memref<1x352xf32, #tpu.memory_space<vmem>>, vector<1x32xf32>
    %c0_11 = arith.constant 0 : index
    %c160 = arith.constant 160 : index
    %8 = vector.load %arg3[%c0_11, %c160] : memref<1x352xf32, #tpu.memory_space<vmem>>, vector<1x32xf32>
    %c0_12 = arith.constant 0 : index
    %c192 = arith.constant 192 : index
    %9 = vector.load %arg3[%c0_12, %c192] : memref<1x352xf32, #tpu.memory_space<vmem>>, vector<1x96xf32>
    %c0_13 = arith.constant 0 : index
    %c288 = arith.constant 288 : index
    %10 = vector.load %arg3[%c0_13, %c288] : memref<1x352xf32, #tpu.memory_space<vmem>>, vector<1x64xf32>
    %c0_14 = arith.constant 0 : index
    %c0_15 = arith.constant 0 : index
    %11 = vector.load %arg0[%c0_14, %c0_15] : memref<16x32xf32, #tpu.memory_space<vmem>>, vector<16x32xf32>
    %cst = arith.constant dense<0.000000e+00> : vector<16xf32>
    %12 = vector.multi_reduction <add>, %11, %cst [1] : vector<16x32xf32> to vector<16xf32>
    %13 = vector.shape_cast %12 : vector<16xf32> to vector<16x1xf32>
    %cst_16 = arith.constant 3.200000e+01 : f32
    %14 = vector.broadcast %cst_16 : f32 to vector<16x1xf32>
    %15 = arith.divf %13, %14 : vector<16x1xf32>
    %16 = vector.broadcast %15 : vector<16x1xf32> to vector<16x32xf32>
    %17 = arith.subf %11, %16 : vector<16x32xf32>
    %18 = arith.mulf %17, %17 : vector<16x32xf32>
    %cst_17 = arith.constant dense<0.000000e+00> : vector<16xf32>
    %19 = vector.multi_reduction <add>, %18, %cst_17 [1] : vector<16x32xf32> to vector<16xf32>
    %20 = vector.shape_cast %19 : vector<16xf32> to vector<16x1xf32>
    %cst_18 = arith.constant 3.200000e+01 : f32
    %21 = vector.broadcast %cst_18 : f32 to vector<16x1xf32>
    %22 = arith.divf %20, %21 : vector<16x1xf32>
    %cst_19 = arith.constant 9.99999974E-6 : f32
    %23 = vector.broadcast %cst_19 : f32 to vector<16x1xf32>
    %24 = arith.addf %22, %23 : vector<16x1xf32>
    %25 = math.rsqrt %24 : vector<16x1xf32>
    %26 = vector.broadcast %25 : vector<16x1xf32> to vector<16x32xf32>
    %27 = arith.mulf %17, %26 : vector<16x32xf32>
    %28 = vector.broadcast %3 : vector<1x32xf32> to vector<16x32xf32>
    %29 = arith.mulf %27, %28 : vector<16x32xf32>
    %30 = vector.broadcast %4 : vector<1x32xf32> to vector<16x32xf32>
    %31 = arith.addf %29, %30 : vector<16x32xf32>
    %32 = arith.truncf %31 : vector<16x32xf32> to vector<16x32xbf16>
    %cst_20 = arith.constant dense<0.000000e+00> : vector<16x96xf32>
    %33 = tpu.matmul %32, %0, %cst_20 {dimension_numbers = #tpu.dot_dimension_numbers<[1], [0], [0], [1], [0, 0, 1, 1], [], []>} : vector<16x32xbf16>, vector<32x96xbf16>, vector<16x96xf32> -> vector<16x96xf32>
    %34 = vector.broadcast %9 : vector<1x96xf32> to vector<16x96xf32>
    %35 = arith.addf %33, %34 : vector<16x96xf32>
    %36 = vector.extract_strided_slice %35 {offsets = [0, 0], sizes = [16, 32], strides = [1, 1]} : vector<16x96xf32> to vector<16x32xf32>
    %37 = vector.extract_strided_slice %35 {offsets = [0, 32], sizes = [16, 32], strides = [1, 1]} : vector<16x96xf32> to vector<16x32xf32>
    %38 = vector.extract_strided_slice %35 {offsets = [0, 64], sizes = [16, 32], strides = [1, 1]} : vector<16x96xf32> to vector<16x32xf32>
    %39 = vector.extract_strided_slice %36 {offsets = [0, 0], sizes = [16, 8], strides = [1, 1]} : vector<16x32xf32> to vector<16x8xf32>
    %40 = vector.extract_strided_slice %36 {offsets = [0, 8], sizes = [16, 8], strides = [1, 1]} : vector<16x32xf32> to vector<16x8xf32>
    %41 = vector.extract_strided_slice %36 {offsets = [0, 16], sizes = [16, 8], strides = [1, 1]} : vector<16x32xf32> to vector<16x8xf32>
    %42 = vector.extract_strided_slice %36 {offsets = [0, 24], sizes = [16, 8], strides = [1, 1]} : vector<16x32xf32> to vector<16x8xf32>
    %43 = vector.shape_cast %39 : vector<16x8xf32> to vector<1x16x8xf32>
    %44 = vector.shape_cast %40 : vector<16x8xf32> to vector<1x16x8xf32>
    %45 = vector.shape_cast %41 : vector<16x8xf32> to vector<1x16x8xf32>
    %46 = vector.shape_cast %42 : vector<16x8xf32> to vector<1x16x8xf32>
    %47 = tpu.concatenate %43, %44, %45, %46 in 0 : vector<1x16x8xf32>, vector<1x16x8xf32>, vector<1x16x8xf32>, vector<1x16x8xf32> -> vector<4x16x8xf32>
    %48 = vector.extract_strided_slice %37 {offsets = [0, 0], sizes = [16, 8], strides = [1, 1]} : vector<16x32xf32> to vector<16x8xf32>
    %49 = vector.extract_strided_slice %37 {offsets = [0, 8], sizes = [16, 8], strides = [1, 1]} : vector<16x32xf32> to vector<16x8xf32>
    %50 = vector.extract_strided_slice %37 {offsets = [0, 16], sizes = [16, 8], strides = [1, 1]} : vector<16x32xf32> to vector<16x8xf32>
    %51 = vector.extract_strided_slice %37 {offsets = [0, 24], sizes = [16, 8], strides = [1, 1]} : vector<16x32xf32> to vector<16x8xf32>
    %52 = vector.shape_cast %48 : vector<16x8xf32> to vector<1x16x8xf32>
    %53 = vector.shape_cast %49 : vector<16x8xf32> to vector<1x16x8xf32>
    %54 = vector.shape_cast %50 : vector<16x8xf32> to vector<1x16x8xf32>
    %55 = vector.shape_cast %51 : vector<16x8xf32> to vector<1x16x8xf32>
    %56 = tpu.concatenate %52, %53, %54, %55 in 0 : vector<1x16x8xf32>, vector<1x16x8xf32>, vector<1x16x8xf32>, vector<1x16x8xf32> -> vector<4x16x8xf32>
    %57 = vector.extract_strided_slice %38 {offsets = [0, 0], sizes = [16, 8], strides = [1, 1]} : vector<16x32xf32> to vector<16x8xf32>
    %58 = vector.extract_strided_slice %38 {offsets = [0, 8], sizes = [16, 8], strides = [1, 1]} : vector<16x32xf32> to vector<16x8xf32>
    %59 = vector.extract_strided_slice %38 {offsets = [0, 16], sizes = [16, 8], strides = [1, 1]} : vector<16x32xf32> to vector<16x8xf32>
    %60 = vector.extract_strided_slice %38 {offsets = [0, 24], sizes = [16, 8], strides = [1, 1]} : vector<16x32xf32> to vector<16x8xf32>
    %61 = vector.shape_cast %57 : vector<16x8xf32> to vector<1x16x8xf32>
    %62 = vector.shape_cast %58 : vector<16x8xf32> to vector<1x16x8xf32>
    %63 = vector.shape_cast %59 : vector<16x8xf32> to vector<1x16x8xf32>
    %64 = vector.shape_cast %60 : vector<16x8xf32> to vector<1x16x8xf32>
    %65 = tpu.concatenate %61, %62, %63, %64 in 0 : vector<1x16x8xf32>, vector<1x16x8xf32>, vector<1x16x8xf32>, vector<1x16x8xf32> -> vector<4x16x8xf32>
    %66 = arith.truncf %47 : vector<4x16x8xf32> to vector<4x16x8xbf16>
    %67 = arith.truncf %56 : vector<4x16x8xf32> to vector<4x16x8xbf16>
    "tpu.trace_start"() <{level = 10 : i32, message = "hnd,hmd->hnm"}> : () -> ()
    %cst_21 = arith.constant dense<0.000000e+00> : vector<4x16x16xf32>
    %68 = tpu.matmul %66, %67, %cst_21 {dimension_numbers = #tpu.dot_dimension_numbers<[2], [2], [1], [1], [0, 0, 0, 1, 1, 1], [0], [0]>} : vector<4x16x8xbf16>, vector<4x16x8xbf16>, vector<4x16x16xf32> -> vector<4x16x16xf32>
    "tpu.trace_stop"() : () -> ()
    %69 = tpu.iota {dimensions = array<i32: 0>} : vector<16x16xi32>
    %70 = arith.sitofp %69 : vector<16x16xi32> to vector<16x16xf32>
    %71 = tpu.iota {dimensions = array<i32: 1>} : vector<16x16xi32>
    %72 = arith.sitofp %71 : vector<16x16xi32> to vector<16x16xf32>
    %73 = arith.subf %70, %72 : vector<16x16xf32>
    %cst_22 = arith.constant 0.000000e+00 : f32
    %74 = vector.broadcast %cst_22 : f32 to vector<16x16xf32>
    %75 = arith.cmpf oge, %73, %74 : vector<16x16xf32>
    %cst_23 = arith.constant 2.000000e+00 : f32
    %76 = vector.broadcast %cst_23 : f32 to vector<16x16xf32>
    %77 = arith.divf %73, %76 : vector<16x16xf32>
    %78 = math.floor %77 : vector<16x16xf32>
    %cst_24 = arith.constant 2.000000e+00 : f32
    %79 = vector.broadcast %cst_24 : f32 to vector<16x16xf32>
    %80 = arith.mulf %78, %79 : vector<16x16xf32>
    %81 = arith.cmpf oeq, %80, %73 : vector<16x16xf32>
    %82 = arith.andi %75, %81 : vector<16x16xi1>
    %83 = vector.shape_cast %82 : vector<16x16xi1> to vector<1x16x16xi1>
    %cst_25 = arith.constant -1.000000e+30 : f32
    %84 = vector.shape_cast %83 : vector<1x16x16xi1> to vector<1x16x16xi1>
    %85 = vector.broadcast %84 : vector<1x16x16xi1> to vector<4x16x16xi1>
    %86 = vector.broadcast %cst_25 : f32 to vector<4x16x16xf32>
    %87 = arith.select %85, %68, %86 : vector<4x16x16xi1>, vector<4x16x16xf32>
    %cst_26 = arith.constant dense<0xFF800000> : vector<4x16xf32>
    %88 = vector.multi_reduction <maximumf>, %87, %cst_26 [2] : vector<4x16x16xf32> to vector<4x16xf32>
    %89 = vector.shape_cast %88 : vector<4x16xf32> to vector<4x16x1xf32>
    %90 = vector.broadcast %89 : vector<4x16x1xf32> to vector<4x16x16xf32>
    %91 = arith.subf %87, %90 : vector<4x16x16xf32>
    %92 = math.exp %91 : vector<4x16x16xf32>
    %cst_27 = arith.constant dense<0.000000e+00> : vector<4x16xf32>
    %93 = vector.multi_reduction <add>, %92, %cst_27 [2] : vector<4x16x16xf32> to vector<4x16xf32>
    %94 = vector.shape_cast %93 : vector<4x16xf32> to vector<4x16x1xf32>
    %95 = tpu.reciprocal %94 {approx = true} : vector<4x16x1xf32> -> vector<4x16x1xf32>
    %96 = vector.broadcast %95 : vector<4x16x1xf32> to vector<4x16x16xf32>
    %97 = arith.mulf %92, %96 : vector<4x16x16xf32>
    %98 = arith.truncf %97 : vector<4x16x16xf32> to vector<4x16x16xbf16>
    %99 = arith.truncf %65 : vector<4x16x8xf32> to vector<4x16x8xbf16>
    "tpu.trace_start"() <{level = 10 : i32, message = "hnm,hmd->hnd"}> : () -> ()
    %cst_28 = arith.constant dense<0.000000e+00> : vector<4x16x8xf32>
    %100 = tpu.matmul %98, %99, %cst_28 {dimension_numbers = #tpu.dot_dimension_numbers<[2], [1], [1], [2], [0, 0, 0, 1, 1, 2], [0], [0]>} : vector<4x16x16xbf16>, vector<4x16x8xbf16>, vector<4x16x8xf32> -> vector<4x16x8xf32>
    "tpu.trace_stop"() : () -> ()
    %101 = vector.extract_strided_slice %100 {offsets = [0, 0, 0], sizes = [1, 16, 8], strides = [1, 1, 1]} : vector<4x16x8xf32> to vector<1x16x8xf32>
    %102 = vector.shape_cast %101 : vector<1x16x8xf32> to vector<16x8xf32>
    %103 = vector.extract_strided_slice %100 {offsets = [1, 0, 0], sizes = [1, 16, 8], strides = [1, 1, 1]} : vector<4x16x8xf32> to vector<1x16x8xf32>
    %104 = vector.shape_cast %103 : vector<1x16x8xf32> to vector<16x8xf32>
    %105 = vector.extract_strided_slice %100 {offsets = [2, 0, 0], sizes = [1, 16, 8], strides = [1, 1, 1]} : vector<4x16x8xf32> to vector<1x16x8xf32>
    %106 = vector.shape_cast %105 : vector<1x16x8xf32> to vector<16x8xf32>
    %107 = vector.extract_strided_slice %100 {offsets = [3, 0, 0], sizes = [1, 16, 8], strides = [1, 1, 1]} : vector<4x16x8xf32> to vector<1x16x8xf32>
    %108 = vector.shape_cast %107 : vector<1x16x8xf32> to vector<16x8xf32>
    %109 = tpu.concatenate %102, %104, %106, %108 in 1 : vector<16x8xf32>, vector<16x8xf32>, vector<16x8xf32>, vector<16x8xf32> -> vector<16x32xf32>
    %110 = arith.truncf %109 : vector<16x32xf32> to vector<16x32xbf16>
    %cst_29 = arith.constant dense<0.000000e+00> : vector<16x32xf32>
    %111 = tpu.matmul %110, %1, %cst_29 {dimension_numbers = #tpu.dot_dimension_numbers<[1], [0], [0], [1], [0, 0, 1, 1], [], []>} : vector<16x32xbf16>, vector<32x32xbf16>, vector<16x32xf32> -> vector<16x32xf32>
    %112 = vector.broadcast %7 : vector<1x32xf32> to vector<16x32xf32>
    %113 = arith.addf %111, %112 : vector<16x32xf32>
    %114 = arith.addf %11, %113 : vector<16x32xf32>
    %cst_30 = arith.constant dense<0.000000e+00> : vector<16xf32>
    %115 = vector.multi_reduction <add>, %114, %cst_30 [1] : vector<16x32xf32> to vector<16xf32>
    %116 = vector.shape_cast %115 : vector<16xf32> to vector<16x1xf32>
    %cst_31 = arith.constant 3.200000e+01 : f32
    %117 = vector.broadcast %cst_31 : f32 to vector<16x1xf32>
    %118 = arith.divf %116, %117 : vector<16x1xf32>
    %119 = vector.broadcast %118 : vector<16x1xf32> to vector<16x32xf32>
    %120 = arith.subf %114, %119 : vector<16x32xf32>
    %121 = arith.mulf %120, %120 : vector<16x32xf32>
    %cst_32 = arith.constant dense<0.000000e+00> : vector<16xf32>
    %122 = vector.multi_reduction <add>, %121, %cst_32 [1] : vector<16x32xf32> to vector<16xf32>
    %123 = vector.shape_cast %122 : vector<16xf32> to vector<16x1xf32>
    %cst_33 = arith.constant 3.200000e+01 : f32
    %124 = vector.broadcast %cst_33 : f32 to vector<16x1xf32>
    %125 = arith.divf %123, %124 : vector<16x1xf32>
    %cst_34 = arith.constant 9.99999974E-6 : f32
    %126 = vector.broadcast %cst_34 : f32 to vector<16x1xf32>
    %127 = arith.addf %125, %126 : vector<16x1xf32>
    %128 = math.rsqrt %127 : vector<16x1xf32>
    %129 = vector.broadcast %128 : vector<16x1xf32> to vector<16x32xf32>
    %130 = arith.mulf %120, %129 : vector<16x32xf32>
    %131 = vector.broadcast %5 : vector<1x32xf32> to vector<16x32xf32>
    %132 = arith.mulf %130, %131 : vector<16x32xf32>
    %133 = vector.broadcast %6 : vector<1x32xf32> to vector<16x32xf32>
    %134 = arith.addf %132, %133 : vector<16x32xf32>
    %135 = arith.truncf %134 : vector<16x32xf32> to vector<16x32xbf16>
    %cst_35 = arith.constant dense<0.000000e+00> : vector<16x64xf32>
    %136 = tpu.matmul %135, %2, %cst_35 {dimension_numbers = #tpu.dot_dimension_numbers<[1], [0], [0], [1], [0, 0, 1, 1], [], []>} : vector<16x32xbf16>, vector<32x64xbf16>, vector<16x64xf32> -> vector<16x64xf32>
    %137 = vector.broadcast %10 : vector<1x64xf32> to vector<16x64xf32>
    %138 = arith.addf %136, %137 : vector<16x64xf32>
    %cst_36 = arith.constant 0.000000e+00 : f32
    %139 = vector.broadcast %cst_36 : f32 to vector<16x64xf32>
    %140 = arith.maximumf %138, %139 : vector<16x64xf32>
    %141 = arith.truncf %140 : vector<16x64xf32> to vector<16x64xbf16>
    %c0_37 = arith.constant 0 : index
    %c0_38 = arith.constant 0 : index
    %142 = vector.load %arg2[%c0_37, %c0_38] : memref<64x32xbf16, #tpu.memory_space<vmem>>, vector<64x32xbf16>
    %cst_39 = arith.constant dense<0.000000e+00> : vector<16x32xf32>
    %143 = tpu.matmul %141, %142, %cst_39 {dimension_numbers = #tpu.dot_dimension_numbers<[1], [0], [0], [1], [0, 0, 1, 1], [], []>} : vector<16x64xbf16>, vector<64x32xbf16>, vector<16x32xf32> -> vector<16x32xf32>
    %144 = vector.broadcast %8 : vector<1x32xf32> to vector<16x32xf32>
    %145 = arith.addf %143, %144 : vector<16x32xf32>
    %146 = arith.addf %114, %145 : vector<16x32xf32>
    %c0_40 = arith.constant 0 : index
    %c0_41 = arith.constant 0 : index
    %147 = vector.load %arg4[%c0_40, %c0_41] : memref<16x32xf32, #tpu.memory_space<vmem>>, vector<16x32xf32>
    tpu.vector_store %arg4[%c0_40, %c0_41], %146 {strides = array<i32>} : memref<16x32xf32, #tpu.memory_space<vmem>>, vector<16x32xf32>,
    return
  }
}

</mosaic_0001>

<llo_original>
// kernel: tpu_custom_call.1
$region0: #{tpu_custom_call.1}
  #allocation0 [shape = 'u32[]', space=smem, size = 0x4, offset = 0x4, fixed_abs, tag = 'smem constant byte address 0x4 - core index']
  #allocation1 [shape = 'u32[144,128]{1,0:T(1,128)}', space=vmem, size = 0x12000, scoped, tag = 'internal scratch']
  %s0 = inlined_call_operand.vmem [shape: f32[16,32], index: 0, kind: input, shape index: {}]
  %s1 = inlined_call_operand.vmem [shape: bf16[32,192], index: 1, kind: input, shape index: {}]
  %s2 = inlined_call_operand.vmem [shape: bf16[64,32], index: 2, kind: input, shape index: {}]
  %s3 = inlined_call_operand.vmem [shape: f32[1,352], index: 3, kind: input, shape index: {}]
  %s4 = inlined_call_operand.hbm [shape: f32[16,32], index: 4, kind: output, shape index: {}]
  %s5 = sld [smem:[#allocation0]]
  $region26: #{tpu_custom_call.1} parent=0
    _
  %s7 = ssub.s32 1, %s5
  %s8 = scalar_select 0, %s7, %s5
  $region1: #{tpu_custom_call.1} parent=0
    #allocation2 [shape = 'u8[8192]{0}', space=vmem, size = 0x2000, scoped, tag = 'output window, operand 0, single buffered']
    #allocation3 [shape = 's32[1]{0}', space=sflag, size = 0x4, scoped, tag = 'scoped memory for tpu_custom_call.1']
    %9 = vsyncpa [#allocation3], 0
    // Predicated region
    $region2: #{tpu_custom_call.1} parent=1 // pred_check
      _
    $region3: #{tpu_custom_call.1} parent=1 // pred_check_branch
      %11 = sbr.rel (0) target = $region5
    $region4: #{tpu_custom_call.1} parent=1 // pred_region
      _
    $region5: #{tpu_custom_call.1} parent=1 // pred_fallthru
      _
    // Predicated region
    $region6: #{tpu_custom_call.1} parent=1 // pred_check
      _
    $region7: #{tpu_custom_call.1} parent=1 // pred_check_branch
      %13 = sbr.rel (0) target = $region9
    $region8: #{tpu_custom_call.1} parent=1 // pred_region
      _
    $region9: #{tpu_custom_call.1} parent=1 // pred_fallthru
      _
    // Predicated region
    $region10: #{tpu_custom_call.1} parent=1 // pred_check
      _
    $region11: #{tpu_custom_call.1} parent=1 // pred_check_branch
      %15 = sbr.rel (0) target = $region13
    $region12: #{tpu_custom_call.1} parent=1 // pred_region
      _
    $region13: #{tpu_custom_call.1} parent=1 // pred_fallthru
      _
    // Predicated region
    $region14: #{tpu_custom_call.1} parent=1 // pred_check
      _
    $region15: #{tpu_custom_call.1} parent=1 // pred_check_branch
      %17 = sbr.rel (0) target = $region17
    $region16: #{tpu_custom_call.1} parent=1 // pred_region
      _
    $region17: #{tpu_custom_call.1} parent=1 // pred_fallthru
      _
    %v19 = vld [vmem:[%s1] sm:$0xf]
    %v20 = vld [vmem:[%s1 + $0x8] sm:$0xf]
    %v21 = vld [vmem:[%s1 + $0x10] sm:$0xf]
    %v22 = vld [vmem:[%s1 + $0x18] sm:$0xf]
    %v23 = vld [vmem:[%s1 + $0x4] sm:$0xf]
    %v24 = vld [vmem:[%s1 + $0xc] sm:$0xf]
    %v25 = vld [vmem:[%s1 + $0x14] sm:$0xf]
    %v26 = vld [vmem:[%s1 + $0x1c] sm:$0xf]
    %v27 = vld [vmem:[%s3] sm:$0x1]
    %v28 = vld [vmem:[%s3 + $0x1] sm:$0x1]
    %v29 = vld [vmem:[%s3 + $0x1] sm:$0x3]
    %v30 = vld [vmem:[%s3 + $0x2] sm:$0x1]
    %v31 = vld [vmem:[%s0] sm:$0xff]
    %v32 = vld [vmem:[%s0 + $0x8] sm:$0xff]
    %vm33 = vcmask 261120
    %v34 = vsel %vm33, %v31, 0.0
    %35 = vadd.xlane.f32.xlu0 %v34
    %v36 = vpop.xlane.xlu0 %35
    %v37 = vsel %vm33, %v32, 0.0
    %38 = vadd.xlane.f32.xlu0 %v37
    %v39 = vpop.xlane.xlu0 %38
    %v40 = vrcp.pop 32.0
    %v41 = vmul.f32 %v36, %v40
    %v42 = vmul.f32 %v39, %v40
    %v43 = vsub.f32 %v31, %v41
    %v44 = vsub.f32 %v32, %v42
    %v45 = vmul.f32 %v43, %v43
    %v46 = vmul.f32 %v44, %v44
    %v47 = vsel %vm33, %v45, 0.0
    %48 = vadd.xlane.f32.xlu0 %v47
    %v49 = vpop.xlane.xlu0 %48
    %v50 = vsel %vm33, %v46, 0.0
    %51 = vadd.xlane.f32.xlu0 %v50
    %v52 = vpop.xlane.xlu0 %51
    %v53 = vmul.f32 %v49, %v40
    %v54 = vmul.f32 %v52, %v40
    %v55 = vadd.f32 %v53, 1e-05
    %v56 = vadd.f32 %v54, 1e-05
    %v57 = vrsqrt.pop %v55
    %v58 = vrsqrt.pop %v56
    %v59 = vmul.f32 %v43, %v57
    %v60 = vmul.f32 %v44, %v58
    %v62 = vlaneseq
    %v63 = vshrl.u32 %v62, 7
    %v64 = vsub.s32 0, %v63
    %v65 = vrot.slane %v27, %v64
    %v67 = vmul.f32 %v59, %v65
    %v68 = vmul.f32 %v60, %v65
    %69 = vrot.lane.b32.xlu0 %v65, 96
    %v70 = vpop.permute.xlu0 %69
    %v72 = vadd.f32 %v67, %v70
    %v73 = vadd.f32 %v68, %v70
    %v74 = vpack.c.bf16 %v73, %v72
    %v76 = vlaneseq
    %v77 = vshrl.u32 %v76, 7
    %v78 = vsub.s32 0, %v77
    %v79 = vrot.slane %v29, %v78
    %v80 = vlaneseq
    %v81 = vshrl.u32 %v80, 7
    %v82 = vsub.s32 1, %v81
    %v83 = vrot.slane %v29, %v82
    %v88 = vunpack.c.l.b16 %v19
    %v89 = vunpack.c.l.b16 %v20
    %v90 = vunpack.c.l.b16 %v21
    %v91 = vunpack.c.l.b16 %v22
    %v92 = vpack.c.b16 %v89, %v88
    %v93 = vpack.c.b16 %v91, %v90
    %96 = vrot.lane.b32.xlu0 %v79, 64
    %v97 = vpop.permute.xlu0 %96
    %98 = vrot.lane.b32.xlu0 %v83, 64
    %v99 = vpop.permute.xlu0 %98
    %vm100 = vcmask 523264
    %v101 = vsel %vm100, %v97, %v99
    %v104 = vsel %vm33, %v74, 0
    %106 = vmatprep.subr.bf16.mxu0 0
    %107 = vmatpush1.bf16.msra.mxu0 0
    %108 = vmatprep.subr.bf16.mxu0 0
    %109 = vmatpush1.bf16.msra.mxu0 0
    %110 = vmatprep.subr.bf16.mxu0 0
    %111 = vmatpush1.bf16.msra.mxu0 0
    %112 = vmatprep.subr.bf16.mxu0 0
    %113 = vmatpush1.bf16.msra.mxu0 0
    %114 = vmatprep.subr.bf16.mxu0 0
    %115 = vmatpush1.bf16.msra.mxu0 0
    %116 = vmatprep.subr.bf16.mxu0 0
    %117 = vmatpush1.bf16.msra.mxu0 0
    %118 = vmatprep.subr.bf16.mxu0 0
    %119 = vmatpush1.bf16.msra.mxu0 %v93
    %120 = vmatprep.subr.bf16.mxu0 0
    %121 = vmatpush1.bf16.msra.mxu0 %v92
    %122 = vmatprep.subr.bf16.mxu0 0
    %123 = vmatpush2.bf16.msra.mxu0 0
    %124 = vmatprep.subr.bf16.mxu0 0
    %125 = vmatpush2.bf16.msra.mxu0 0
    %126 = vmatprep.subr.bf16.mxu0 0
    %127 = vmatpush2.bf16.msra.mxu0 0
    %128 = vmatprep.subr.bf16.mxu0 0
    %129 = vmatpush2.bf16.msra.mxu0 0
    %130 = vmatprep.subr.bf16.mxu0 0
    %131 = vmatpush2.bf16.msra.mxu0 0
    %132 = vmatprep.subr.bf16.mxu0 0
    %133 = vmatpush2.bf16.msra.mxu0 0
    %134 = vmatprep.subr.bf16.mxu0 0
    %135 = vmatpush2.bf16.msra.mxu0 0
    %136 = vmatprep.subr.bf16.mxu0 0
    %137 = vmatpush2.bf16.msra.mxu0 0
    %138 = vmatprep.mubr.bf16.mxu0 0
    %139 = vmatmul.mubr.bf16.gmra.mxu0 %v104
    %v140 = vpop.f32.mrf.mxu0
    %v141 = vadd.f32 %v101, %v140
    %v142 = vpop.f32.mrf.mxu0
    %v143 = vpop.f32.mrf.mxu0
    %v144 = vadd.f32 %v101, %v143
    %v145 = vpop.f32.mrf.mxu0
    %146 = vdwg.mxu0
    %149 = vrot.lane.b32.xlu0 %v141, 120
    %v150 = vpop.permute.xlu0 %149
    %151 = vrot.lane.b32.xlu0 %v144, 120
    %v152 = vpop.permute.xlu0 %151
    %155 = vrot.lane.b32.xlu0 %v141, 112
    %v156 = vpop.permute.xlu0 %155
    %157 = vrot.lane.b32.xlu0 %v144, 112
    %v158 = vpop.permute.xlu0 %157
    %161 = vrot.lane.b32.xlu0 %v141, 104
    %v162 = vpop.permute.xlu0 %161
    %163 = vrot.lane.b32.xlu0 %v144, 104
    %v164 = vpop.permute.xlu0 %163
    %v167 = vpack.c.bf16 %v144, %v141
    %v168 = vpack.c.bf16 %v152, %v150
    %v169 = vpack.c.bf16 %v158, %v156
    %v170 = vpack.c.bf16 %v164, %v162
    %172 = vrot.lane.b32.xlu0 %v167, 96
    %v173 = vpop.permute.xlu0 %172
    %vm174 = vcmask 64512
    %v176 = vsel %vm174, %v167, 0
    %v179 = vsel %vm174, %v173, 0
    %181 = vmatprep.subr.bf16.mxu0 0
    %182 = vmatpush1.bf16.xpose.msra.mxu0 0
    %183 = vmatprep.subr.bf16.mxu0 0
    %184 = vmatpush1.bf16.xpose.msra.mxu0 0
    %185 = vmatprep.subr.bf16.mxu0 0
    %186 = vmatpush1.bf16.xpose.msra.mxu0 0
    %187 = vmatprep.subr.bf16.mxu0 0
    %188 = vmatpush1.bf16.xpose.msra.mxu0 0
    %189 = vmatprep.subr.bf16.mxu0 0
    %190 = vmatpush1.bf16.xpose.msra.mxu0 0
    %191 = vmatprep.subr.bf16.mxu0 0
    %192 = vmatpush1.bf16.xpose.msra.mxu0 0
    %193 = vmatprep.subr.bf16.mxu0 0
    %194 = vmatpush1.bf16.xpose.msra.mxu0 0
    %195 = vmatprep.subr.bf16.mxu0 0
    %196 = vmatpush1.bf16.xpose.msra.mxu0 %v179
    %197 = vmatprep.subr.bf16.mxu0 0
    %198 = vmatpush2.bf16.xpose.msra.mxu0 0
    %199 = vmatprep.subr.bf16.mxu0 0
    %200 = vmatpush2.bf16.xpose.msra.mxu0 0
    %201 = vmatprep.subr.bf16.mxu0 0
    %202 = vmatpush2.bf16.xpose.msra.mxu0 0
    %203 = vmatprep.subr.bf16.mxu0 0
    %204 = vmatpush2.bf16.xpose.msra.mxu0 0
    %205 = vmatprep.subr.bf16.mxu0 0
    %206 = vmatpush2.bf16.xpose.msra.mxu0 0
    %207 = vmatprep.subr.bf16.mxu0 0
    %208 = vmatpush2.bf16.xpose.msra.mxu0 0
    %209 = vmatprep.subr.bf16.mxu0 0
    %210 = vmatpush2.bf16.xpose.msra.mxu0 0
    %211 = vmatprep.subr.bf16.mxu0 0
    %212 = vmatpush2.bf16.xpose.msra.mxu0 0
    %213 = vmatprep.mubr.bf16.mxu0 0
    %214 = vmatmul.mubr.bf16.gmra.mxu0 %v176
    %v215 = vpop.f32.mrf.mxu0
    %v216 = vadd.f32 0.0, %v215
    %v217 = vpop.f32.mrf.mxu0
    %v218 = vpop.f32.mrf.mxu0
    %v219 = vadd.f32 0.0, %v218
    %v220 = vpop.f32.mrf.mxu0
    %221 = vdwg.mxu0
    %223 = vrot.lane.b32.xlu0 %v168, 96
    %v224 = vpop.permute.xlu0 %223
    %v226 = vsel %vm174, %v168, 0
    %v229 = vsel %vm174, %v224, 0
    %231 = vmatprep.subr.bf16.mxu0 0
    %232 = vmatpush1.bf16.xpose.msra.mxu0 0
    %233 = vmatprep.subr.bf16.mxu0 0
    %234 = vmatpush1.bf16.xpose.msra.mxu0 0
    %235 = vmatprep.subr.bf16.mxu0 0
    %236 = vmatpush1.bf16.xpose.msra.mxu0 0
    %237 = vmatprep.subr.bf16.mxu0 0
    %238 = vmatpush1.bf16.xpose.msra.mxu0 0
    %239 = vmatprep.subr.bf16.mxu0 0
    %240 = vmatpush1.bf16.xpose.msra.mxu0 0
    %241 = vmatprep.subr.bf16.mxu0 0
    %242 = vmatpush1.bf16.xpose.msra.mxu0 0
    %243 = vmatprep.subr.bf16.mxu0 0
    %244 = vmatpush1.bf16.xpose.msra.mxu0 0
    %245 = vmatprep.subr.bf16.mxu0 0
    %246 = vmatpush1.bf16.xpose.msra.mxu0 %v229
    %247 = vmatprep.subr.bf16.mxu0 0
    %248 = vmatpush2.bf16.xpose.msra.mxu0 0
    %249 = vmatprep.subr.bf16.mxu0 0
    %250 = vmatpush2.bf16.xpose.msra.mxu0 0
    %251 = vmatprep.subr.bf16.mxu0 0
    %252 = vmatpush2.bf16.xpose.msra.mxu0 0
    %253 = vmatprep.subr.bf16.mxu0 0
    %254 = vmatpush2.bf16.xpose.msra.mxu0 0
    %255 = vmatprep.subr.bf16.mxu0 0
    %256 = vmatpush2.bf16.xpose.msra.mxu0 0
    %257 = vmatprep.subr.bf16.mxu0 0
    %258 = vmatpush2.bf16.xpose.msra.mxu0 0
    %259 = vmatprep.subr.bf16.mxu0 0
    %260 = vmatpush2.bf16.xpose.msra.mxu0 0
    %261 = vmatprep.subr.bf16.mxu0 0
    %262 = vmatpush2.bf16.xpose.msra.mxu0 0
    %263 = vmatprep.mubr.bf16.mxu0 0
    %264 = vmatmul.mubr.bf16.gmra.mxu0 %v226
    %v265 = vpop.f32.mrf.mxu0
    %v266 = vadd.f32 0.0, %v265
    %v267 = vpop.f32.mrf.mxu0
    %v268 = vpop.f32.mrf.mxu0
    %v269 = vadd.f32 0.0, %v268
    %v270 = vpop.f32.mrf.mxu0
    %271 = vdwg.mxu0
    %273 = vrot.lane.b32.xlu0 %v169, 96
    %v274 = vpop.permute.xlu0 %273
    %v276 = vsel %vm174, %v169, 0
    %v279 = vsel %vm174, %v274, 0
    %281 = vmatprep.subr.bf16.mxu0 0
    %282 = vmatpush1.bf16.xpose.msra.mxu0 0
    %283 = vmatprep.subr.bf16.mxu0 0
    %284 = vmatpush1.bf16.xpose.msra.mxu0 0
    %285 = vmatprep.subr.bf16.mxu0 0
    %286 = vmatpush1.bf16.xpose.msra.mxu0 0
    %287 = vmatprep.subr.bf16.mxu0 0
    %288 = vmatpush1.bf16.xpose.msra.mxu0 0
    %289 = vmatprep.subr.bf16.mxu0 0
    %290 = vmatpush1.bf16.xpose.msra.mxu0 0
    %291 = vmatprep.subr.bf16.mxu0 0
    %292 = vmatpush1.bf16.xpose.msra.mxu0 0
    %293 = vmatprep.subr.bf16.mxu0 0
    %294 = vmatpush1.bf16.xpose.msra.mxu0 0
    %295 = vmatprep.subr.bf16.mxu0 0
    %296 = vmatpush1.bf16.xpose.msra.mxu0 %v279
    %297 = vmatprep.subr.bf16.mxu0 0
    %298 = vmatpush2.bf16.xpose.msra.mxu0 0
    %299 = vmatprep.subr.bf16.mxu0 0
    %300 = vmatpush2.bf16.xpose.msra.mxu0 0
    %301 = vmatprep.subr.bf16.mxu0 0
    %302 = vmatpush2.bf16.xpose.msra.mxu0 0
    %303 = vmatprep.subr.bf16.mxu0 0
    %304 = vmatpush2.bf16.xpose.msra.mxu0 0
    %305 = vmatprep.subr.bf16.mxu0 0
    %306 = vmatpush2.bf16.xpose.msra.mxu0 0
    %307 = vmatprep.subr.bf16.mxu0 0
    %308 = vmatpush2.bf16.xpose.msra.mxu0 0
    %309 = vmatprep.subr.bf16.mxu0 0
    %310 = vmatpush2.bf16.xpose.msra.mxu0 0
    %311 = vmatprep.subr.bf16.mxu0 0
    %312 = vmatpush2.bf16.xpose.msra.mxu0 0
    %313 = vmatprep.mubr.bf16.mxu0 0
    %314 = vmatmul.mubr.bf16.gmra.mxu0 %v276
    %v315 = vpop.f32.mrf.mxu0
    %v316 = vadd.f32 0.0, %v315
    %v317 = vpop.f32.mrf.mxu0
    %v318 = vpop.f32.mrf.mxu0
    %v319 = vadd.f32 0.0, %v318
    %v320 = vpop.f32.mrf.mxu0
    %321 = vdwg.mxu0
    %323 = vrot.lane.b32.xlu0 %v170, 96
    %v324 = vpop.permute.xlu0 %323
    %v326 = vsel %vm174, %v170, 0
    %v329 = vsel %vm174, %v324, 0
    %331 = vmatprep.subr.bf16.mxu0 0
    %332 = vmatpush1.bf16.xpose.msra.mxu0 0
    %333 = vmatprep.subr.bf16.mxu0 0
    %334 = vmatpush1.bf16.xpose.msra.mxu0 0
    %335 = vmatprep.subr.bf16.mxu0 0
    %336 = vmatpush1.bf16.xpose.msra.mxu0 0
    %337 = vmatprep.subr.bf16.mxu0 0
    %338 = vmatpush1.bf16.xpose.msra.mxu0 0
    %339 = vmatprep.subr.bf16.mxu0 0
    %340 = vmatpush1.bf16.xpose.msra.mxu0 0
    %341 = vmatprep.subr.bf16.mxu0 0
    %342 = vmatpush1.bf16.xpose.msra.mxu0 0
    %343 = vmatprep.subr.bf16.mxu0 0
    %344 = vmatpush1.bf16.xpose.msra.mxu0 0
    %345 = vmatprep.subr.bf16.mxu0 0
    %346 = vmatpush1.bf16.xpose.msra.mxu0 %v329
    %347 = vmatprep.subr.bf16.mxu0 0
    %348 = vmatpush2.bf16.xpose.msra.mxu0 0
    %349 = vmatprep.subr.bf16.mxu0 0
    %350 = vmatpush2.bf16.xpose.msra.mxu0 0
    %351 = vmatprep.subr.bf16.mxu0 0
    %352 = vmatpush2.bf16.xpose.msra.mxu0 0
    %353 = vmatprep.subr.bf16.mxu0 0
    %354 = vmatpush2.bf16.xpose.msra.mxu0 0
    %355 = vmatprep.subr.bf16.mxu0 0
    %356 = vmatpush2.bf16.xpose.msra.mxu0 0
    %357 = vmatprep.subr.bf16.mxu0 0
    %358 = vmatpush2.bf16.xpose.msra.mxu0 0
    %359 = vmatprep.subr.bf16.mxu0 0
    %360 = vmatpush2.bf16.xpose.msra.mxu0 0
    %361 = vmatprep.subr.bf16.mxu0 0
    %362 = vmatpush2.bf16.xpose.msra.mxu0 0
    %363 = vmatprep.mubr.bf16.mxu0 0
    %364 = vmatmul.mubr.bf16.gmra.mxu0 %v326
    %v365 = vpop.f32.mrf.mxu0
    %v366 = vadd.f32 0.0, %v365
    %v367 = vpop.f32.mrf.mxu0
    %v368 = vpop.f32.mrf.mxu0
    %v369 = vadd.f32 0.0, %v368
    %v370 = vpop.f32.mrf.mxu0
    %371 = vdwg.mxu0
    %v372 = vlaneseq
    %v373 = vshrl.u32 %v372, 7
    %v374 = vadd.s32 %v373, 8
    %v375 = vcvt.s32.f32 %v373
    %v376 = vcvt.s32.f32 %v374
    %v377 = vlaneseq
    %v378 = vand.u32 %v377, 127
    %v379 = vcvt.s32.f32 %v378
    %v380 = vsub.f32 %v375, %v379
    %v381 = vsub.f32 %v376, %v379
    %vm382 = vcmp.ge.f32.partialorder %v380, 0.0
    %vm383 = vcmp.ge.f32.partialorder %v381, 0.0
    %v384 = vrcp.pop 2.0
    %v385 = vmul.f32 %v380, %v384
    %v386 = vmul.f32 %v381, %v384
    %v387 = vfloor.f32 %v385
    %v388 = vfloor.f32 %v386
    %v389 = vmul.f32 %v387, 2.0
    %v390 = vmul.f32 %v388, 2.0
    %vm391 = vcmp.eq.f32.partialorder %v389, %v380
    %vm392 = vcmp.eq.f32.partialorder %v390, %v381
    %vm393 = vmand %vm382, %vm391
    %vm394 = vmand %vm383, %vm392
    %v395 = vsel %vm393, 1, 0
    %v396 = vsel %vm394, 1, 0
    %vm397 = vcmp.eq.s32.totalorder %v395, 1
    %vm398 = vcmp.eq.s32.totalorder %v396, 1
    %v399 = vsel %vm397, %v216, -1e+30
    %v400 = vsel %vm398, %v219, -1e+30
    %v401 = vsel %vm397, %v266, -1e+30
    %v402 = vsel %vm398, %v269, -1e+30
    %v403 = vsel %vm397, %v316, -1e+30
    %v404 = vsel %vm398, %v319, -1e+30
    %v405 = vsel %vm397, %v366, -1e+30
    %v406 = vsel %vm398, %v369, -1e+30
    %vm407 = vcmask 130048
    %v408 = vsel %vm407, %v399, -inf
    %409 = vmax.xlane.f32.xlu0 %v408
    %v410 = vpop.xlane.xlu0 %409
    %v411 = vsel %vm407, %v400, -inf
    %412 = vmax.xlane.f32.xlu0 %v411
    %v413 = vpop.xlane.xlu0 %412
    %v414 = vsel %vm407, %v401, -inf
    %415 = vmax.xlane.f32.xlu0 %v414
    %v416 = vpop.xlane.xlu0 %415
    %v417 = vsel %vm407, %v402, -inf
    %418 = vmax.xlane.f32.xlu0 %v417
    %v419 = vpop.xlane.xlu0 %418
    %v420 = vsel %vm407, %v403, -inf
    %421 = vmax.xlane.f32.xlu0 %v420
    %v422 = vpop.xlane.xlu0 %421
    %v423 = vsel %vm407, %v404, -inf
    %424 = vmax.xlane.f32.xlu0 %v423
    %v425 = vpop.xlane.xlu0 %424
    %v426 = vsel %vm407, %v405, -inf
    %427 = vmax.xlane.f32.xlu0 %v426
    %v428 = vpop.xlane.xlu0 %427
    %v429 = vsel %vm407, %v406, -inf
    %430 = vmax.xlane.f32.xlu0 %v429
    %v431 = vpop.xlane.xlu0 %430
    %v432 = vsub.f32 %v399, %v410
    %v433 = vsub.f32 %v400, %v413
    %v434 = vsub.f32 %v401, %v416
    %v435 = vsub.f32 %v402, %v419
    %v436 = vsub.f32 %v403, %v422
    %v437 = vsub.f32 %v404, %v425
    %v438 = vsub.f32 %v405, %v428
    %v439 = vsub.f32 %v406, %v431
    %v440 = vmul.f32 %v432, 1.442695
    %v441 = vpow.pop %v440
    %v442 = vmul.f32 %v433, 1.442695
    %v443 = vpow.pop %v442
    %v444 = vmul.f32 %v434, 1.442695
    %v445 = vpow.pop %v444
    %v446 = vmul.f32 %v435, 1.442695
    %v447 = vpow.pop %v446
    %v448 = vmul.f32 %v436, 1.442695
    %v449 = vpow.pop %v448
    %v450 = vmul.f32 %v437, 1.442695
    %v451 = vpow.pop %v450
    %v452 = vmul.f32 %v438, 1.442695
    %v453 = vpow.pop %v452
    %v454 = vmul.f32 %v439, 1.442695
    %v455 = vpow.pop %v454
    %v456 = vsel %vm407, %v441, 0.0
    %457 = vadd.xlane.f32.xlu0 %v456
    %v458 = vpop.xlane.xlu0 %457
    %v459 = vsel %vm407, %v443, 0.0
    %460 = vadd.xlane.f32.xlu0 %v459
    %v461 = vpop.xlane.xlu0 %460
    %v462 = vsel %vm407, %v445, 0.0
    %463 = vadd.xlane.f32.xlu0 %v462
    %v464 = vpop.xlane.xlu0 %463
    %v465 = vsel %vm407, %v447, 0.0
    %466 = vadd.xlane.f32.xlu0 %v465
    %v467 = vpop.xlane.xlu0 %466
    %v468 = vsel %vm407, %v449, 0.0
    %469 = vadd.xlane.f32.xlu0 %v468
    %v470 = vpop.xlane.xlu0 %469
    %v471 = vsel %vm407, %v451, 0.0
    %472 = vadd.xlane.f32.xlu0 %v471
    %v473 = vpop.xlane.xlu0 %472
    %v474 = vsel %vm407, %v453, 0.0
    %475 = vadd.xlane.f32.xlu0 %v474
    %v476 = vpop.xlane.xlu0 %475
    %v477 = vsel %vm407, %v455, 0.0
    %478 = vadd.xlane.f32.xlu0 %v477
    %v479 = vpop.xlane.xlu0 %478
    %v480 = vrcp.pop %v458
    %v481 = vrcp.pop %v461
    %v482 = vrcp.pop %v464
    %v483 = vrcp.pop %v467
    %v484 = vrcp.pop %v470
    %v485 = vrcp.pop %v473
    %v486 = vrcp.pop %v476
    %v487 = vrcp.pop %v479
    %v488 = vmul.f32 %v441, %v480
    %v489 = vmul.f32 %v443, %v481
    %v490 = vmul.f32 %v445, %v482
    %v491 = vmul.f32 %v447, %v483
    %v492 = vmul.f32 %v449, %v484
    %v493 = vmul.f32 %v451, %v485
    %v494 = vmul.f32 %v453, %v486
    %v495 = vmul.f32 %v455, %v487
    %v496 = vpack.c.bf16 %v489, %v488
    %v497 = vpack.c.bf16 %v491, %v490
    %v498 = vpack.c.bf16 %v493, %v492
    %v499 = vpack.c.bf16 %v495, %v494
    %500 = vrot.lane.b32.xlu0 %v167, 64
    %v501 = vpop.permute.xlu0 %500
    %v504 = vsel %vm407, %v496, 0
    %506 = vmatprep.subr.bf16.mxu0 0
    %507 = vmatpush1.bf16.msra.mxu0 0
    %508 = vmatprep.subr.bf16.mxu0 0
    %509 = vmatpush1.bf16.msra.mxu0 0
    %510 = vmatprep.subr.bf16.mxu0 0
    %511 = vmatpush1.bf16.msra.mxu0 0
    %512 = vmatprep.subr.bf16.mxu0 0
    %513 = vmatpush1.bf16.msra.mxu0 0
    %514 = vmatprep.subr.bf16.mxu0 0
    %515 = vmatpush1.bf16.msra.mxu0 0
    %516 = vmatprep.subr.bf16.mxu0 0
    %517 = vmatpush1.bf16.msra.mxu0 0
    %518 = vmatprep.subr.bf16.mxu0 0
    %519 = vmatpush1.bf16.msra.mxu0 0
    %520 = vmatprep.subr.bf16.mxu0 0
    %521 = vmatpush1.bf16.msra.mxu0 %v501
    %522 = vmatprep.subr.bf16.mxu0 0
    %523 = vmatpush2.bf16.msra.mxu0 0
    %524 = vmatprep.subr.bf16.mxu0 0
    %525 = vmatpush2.bf16.msra.mxu0 0
    %526 = vmatprep.subr.bf16.mxu0 0
    %527 = vmatpush2.bf16.msra.mxu0 0
    %528 = vmatprep.subr.bf16.mxu0 0
    %529 = vmatpush2.bf16.msra.mxu0 0
    %530 = vmatprep.subr.bf16.mxu0 0
    %531 = vmatpush2.bf16.msra.mxu0 0
    %532 = vmatprep.subr.bf16.mxu0 0
    %533 = vmatpush2.bf16.msra.mxu0 0
    %534 = vmatprep.subr.bf16.mxu0 0
    %535 = vmatpush2.bf16.msra.mxu0 0
    %536 = vmatprep.subr.bf16.mxu0 0
    %537 = vmatpush2.bf16.msra.mxu0 0
    %538 = vmatprep.mubr.bf16.mxu0 0
    %539 = vmatmul.mubr.bf16.gmra.mxu0 %v504
    %v540 = vpop.f32.mrf.mxu0
    %v541 = vadd.f32 0.0, %v540
    %v542 = vpop.f32.mrf.mxu0
    %v543 = vpop.f32.mrf.mxu0
    %v544 = vadd.f32 0.0, %v543
    %v545 = vpop.f32.mrf.mxu0
    %546 = vdwg.mxu0
    %547 = vrot.lane.b32.xlu0 %v168, 64
    %v548 = vpop.permute.xlu0 %547
    %v551 = vsel %vm407, %v497, 0
    %553 = vmatprep.subr.bf16.mxu0 0
    %554 = vmatpush1.bf16.msra.mxu0 0
    %555 = vmatprep.subr.bf16.mxu0 0
    %556 = vmatpush1.bf16.msra.mxu0 0
    %557 = vmatprep.subr.bf16.mxu0 0
    %558 = vmatpush1.bf16.msra.mxu0 0
    %559 = vmatprep.subr.bf16.mxu0 0
    %560 = vmatpush1.bf16.msra.mxu0 0
    %561 = vmatprep.subr.bf16.mxu0 0
    %562 = vmatpush1.bf16.msra.mxu0 0
    %563 = vmatprep.subr.bf16.mxu0 0
    %564 = vmatpush1.bf16.msra.mxu0 0
    %565 = vmatprep.subr.bf16.mxu0 0
    %566 = vmatpush1.bf16.msra.mxu0 0
    %567 = vmatprep.subr.bf16.mxu0 0
    %568 = vmatpush1.bf16.msra.mxu0 %v548
    %569 = vmatprep.subr.bf16.mxu0 0
    %570 = vmatpush2.bf16.msra.mxu0 0
    %571 = vmatprep.subr.bf16.mxu0 0
    %572 = vmatpush2.bf16.msra.mxu0 0
    %573 = vmatprep.subr.bf16.mxu0 0
    %574 = vmatpush2.bf16.msra.mxu0 0
    %575 = vmatprep.subr.bf16.mxu0 0
    %576 = vmatpush2.bf16.msra.mxu0 0
    %577 = vmatprep.subr.bf16.mxu0 0
    %578 = vmatpush2.bf16.msra.mxu0 0
    %579 = vmatprep.subr.bf16.mxu0 0
    %580 = vmatpush2.bf16.msra.mxu0 0
    %581 = vmatprep.subr.bf16.mxu0 0
    %582 = vmatpush2.bf16.msra.mxu0 0
    %583 = vmatprep.subr.bf16.mxu0 0
    %584 = vmatpush2.bf16.msra.mxu0 0
    %585 = vmatprep.mubr.bf16.mxu0 0
    %586 = vmatmul.mubr.bf16.gmra.mxu0 %v551
    %v587 = vpop.f32.mrf.mxu0
    %v588 = vadd.f32 0.0, %v587
    %v589 = vpop.f32.mrf.mxu0
    %v590 = vpop.f32.mrf.mxu0
    %v591 = vadd.f32 0.0, %v590
    %v592 = vpop.f32.mrf.mxu0
    %593 = vdwg.mxu0
    %594 = vrot.lane.b32.xlu0 %v169, 64
    %v595 = vpop.permute.xlu0 %594
    %v598 = vsel %vm407, %v498, 0
    %600 = vmatprep.subr.bf16.mxu0 0
    %601 = vmatpush1.bf16.msra.mxu0 0
    %602 = vmatprep.subr.bf16.mxu0 0
    %603 = vmatpush1.bf16.msra.mxu0 0
    %604 = vmatprep.subr.bf16.mxu0 0
    %605 = vmatpush1.bf16.msra.mxu0 0
    %606 = vmatprep.subr.bf16.mxu0 0
    %607 = vmatpush1.bf16.msra.mxu0 0
    %608 = vmatprep.subr.bf16.mxu0 0
    %609 = vmatpush1.bf16.msra.mxu0 0
    %610 = vmatprep.subr.bf16.mxu0 0
    %611 = vmatpush1.bf16.msra.mxu0 0
    %612 = vmatprep.subr.bf16.mxu0 0
    %613 = vmatpush1.bf16.msra.mxu0 0
    %614 = vmatprep.subr.bf16.mxu0 0
    %615 = vmatpush1.bf16.msra.mxu0 %v595
    %616 = vmatprep.subr.bf16.mxu0 0
    %617 = vmatpush2.bf16.msra.mxu0 0
    %618 = vmatprep.subr.bf16.mxu0 0
    %619 = vmatpush2.bf16.msra.mxu0 0
    %620 = vmatprep.subr.bf16.mxu0 0
    %621 = vmatpush2.bf16.msra.mxu0 0
    %622 = vmatprep.subr.bf16.mxu0 0
    %623 = vmatpush2.bf16.msra.mxu0 0
    %624 = vmatprep.subr.bf16.mxu0 0
    %625 = vmatpush2.bf16.msra.mxu0 0
    %626 = vmatprep.subr.bf16.mxu0 0
    %627 = vmatpush2.bf16.msra.mxu0 0
    %628 = vmatprep.subr.bf16.mxu0 0
    %629 = vmatpush2.bf16.msra.mxu0 0
    %630 = vmatprep.subr.bf16.mxu0 0
    %631 = vmatpush2.bf16.msra.mxu0 0
    %632 = vmatprep.mubr.bf16.mxu0 0
    %633 = vmatmul.mubr.bf16.gmra.mxu0 %v598
    %v634 = vpop.f32.mrf.mxu0
    %v635 = vadd.f32 0.0, %v634
    %v636 = vpop.f32.mrf.mxu0
    %v637 = vpop.f32.mrf.mxu0
    %v638 = vadd.f32 0.0, %v637
    %v639 = vpop.f32.mrf.mxu0
    %640 = vdwg.mxu0
    %641 = vrot.lane.b32.xlu0 %v170, 64
    %v642 = vpop.permute.xlu0 %641
    %v645 = vsel %vm407, %v499, 0
    %647 = vmatprep.subr.bf16.mxu0 0
    %648 = vmatpush1.bf16.msra.mxu0 0
    %649 = vmatprep.subr.bf16.mxu0 0
    %650 = vmatpush1.bf16.msra.mxu0 0
    %651 = vmatprep.subr.bf16.mxu0 0
    %652 = vmatpush1.bf16.msra.mxu0 0
    %653 = vmatprep.subr.bf16.mxu0 0
    %654 = vmatpush1.bf16.msra.mxu0 0
    %655 = vmatprep.subr.bf16.mxu0 0
    %656 = vmatpush1.bf16.msra.mxu0 0
    %657 = vmatprep.subr.bf16.mxu0 0
    %658 = vmatpush1.bf16.msra.mxu0 0
    %659 = vmatprep.subr.bf16.mxu0 0
    %660 = vmatpush1.bf16.msra.mxu0 0
    %661 = vmatprep.subr.bf16.mxu0 0
    %662 = vmatpush1.bf16.msra.mxu0 %v642
    %663 = vmatprep.subr.bf16.mxu0 0
    %664 = vmatpush2.bf16.msra.mxu0 0
    %665 = vmatprep.subr.bf16.mxu0 0
    %666 = vmatpush2.bf16.msra.mxu0 0
    %667 = vmatprep.subr.bf16.mxu0 0
    %668 = vmatpush2.bf16.msra.mxu0 0
    %669 = vmatprep.subr.bf16.mxu0 0
    %670 = vmatpush2.bf16.msra.mxu0 0
    %671 = vmatprep.subr.bf16.mxu0 0
    %672 = vmatpush2.bf16.msra.mxu0 0
    %673 = vmatprep.subr.bf16.mxu0 0
    %674 = vmatpush2.bf16.msra.mxu0 0
    %675 = vmatprep.subr.bf16.mxu0 0
    %676 = vmatpush2.bf16.msra.mxu0 0
    %677 = vmatprep.subr.bf16.mxu0 0
    %678 = vmatpush2.bf16.msra.mxu0 0
    %679 = vmatprep.mubr.bf16.mxu0 0
    %680 = vmatmul.mubr.bf16.gmra.mxu0 %v645
    %v681 = vpop.f32.mrf.mxu0
    %v682 = vadd.f32 0.0, %v681
    %v683 = vpop.f32.mrf.mxu0
    %v684 = vpop.f32.mrf.mxu0
    %v685 = vadd.f32 0.0, %v684
    %v686 = vpop.f32.mrf.mxu0
    %687 = vdwg.mxu0
    %690 = vrot.lane.b32.xlu0 %v588, 8
    %v691 = vpop.permute.xlu0 %690
    %692 = vrot.lane.b32.xlu0 %v591, 8
    %v693 = vpop.permute.xlu0 %692
    %698 = vrot.lane.b32.xlu0 %v635, 16
    %v699 = vpop.permute.xlu0 %698
    %700 = vrot.lane.b32.xlu0 %v638, 16
    %v701 = vpop.permute.xlu0 %700
    %706 = vrot.lane.b32.xlu0 %v682, 24
    %v707 = vpop.permute.xlu0 %706
    %708 = vrot.lane.b32.xlu0 %v685, 24
    %v709 = vpop.permute.xlu0 %708
    %v712 = vsel %vm174, %v541, %v691
    %v713 = vsel %vm174, %v544, %v693
    %v714 = vsel %vm407, %v712, %v699
    %v715 = vsel %vm407, %v713, %v701
    %vm716 = vcmask 195584
    %v717 = vsel %vm716, %v714, %v707
    %v718 = vsel %vm716, %v715, %v709
    %v719 = vpack.c.bf16 %v718, %v717
    %v721 = vlaneseq
    %v722 = vshrl.u32 %v721, 7
    %v723 = vsub.s32 0, %v722
    %v724 = vrot.slane %v28, %v723
    %726 = vrot.lane.b32.xlu0 %v92, 32
    %v727 = vpop.permute.xlu0 %726
    %728 = vrot.lane.b32.xlu0 %v93, 32
    %v729 = vpop.permute.xlu0 %728
    %v733 = vsel %vm33, %v719, 0
    %735 = vmatprep.subr.bf16.mxu0 0
    %736 = vmatpush1.bf16.msra.mxu0 0
    %737 = vmatprep.subr.bf16.mxu0 0
    %738 = vmatpush1.bf16.msra.mxu0 0
    %739 = vmatprep.subr.bf16.mxu0 0
    %740 = vmatpush1.bf16.msra.mxu0 0
    %741 = vmatprep.subr.bf16.mxu0 0
    %742 = vmatpush1.bf16.msra.mxu0 0
    %743 = vmatprep.subr.bf16.mxu0 0
    %744 = vmatpush1.bf16.msra.mxu0 0
    %745 = vmatprep.subr.bf16.mxu0 0
    %746 = vmatpush1.bf16.msra.mxu0 0
    %747 = vmatprep.subr.bf16.mxu0 0
    %748 = vmatpush1.bf16.msra.mxu0 %v729
    %749 = vmatprep.subr.bf16.mxu0 0
    %750 = vmatpush1.bf16.msra.mxu0 %v727
    %751 = vmatprep.subr.bf16.mxu0 0
    %752 = vmatpush2.bf16.msra.mxu0 0
    %753 = vmatprep.subr.bf16.mxu0 0
    %754 = vmatpush2.bf16.msra.mxu0 0
    %755 = vmatprep.subr.bf16.mxu0 0
    %756 = vmatpush2.bf16.msra.mxu0 0
    %757 = vmatprep.subr.bf16.mxu0 0
    %758 = vmatpush2.bf16.msra.mxu0 0
    %759 = vmatprep.subr.bf16.mxu0 0
    %760 = vmatpush2.bf16.msra.mxu0 0
    %761 = vmatprep.subr.bf16.mxu0 0
    %762 = vmatpush2.bf16.msra.mxu0 0
    %763 = vmatprep.subr.bf16.mxu0 0
    %764 = vmatpush2.bf16.msra.mxu0 0
    %765 = vmatprep.subr.bf16.mxu0 0
    %766 = vmatpush2.bf16.msra.mxu0 0
    %767 = vmatprep.mubr.bf16.mxu0 0
    %768 = vmatmul.mubr.bf16.gmra.mxu0 %v733
    %v769 = vpop.f32.mrf.mxu0
    %v770 = vadd.f32 %v724, %v769
    %v771 = vpop.f32.mrf.mxu0
    %v772 = vpop.f32.mrf.mxu0
    %v773 = vadd.f32 %v724, %v772
    %v774 = vpop.f32.mrf.mxu0
    %775 = vdwg.mxu0
    %v776 = vadd.f32 %v31, %v770
    %v777 = vadd.f32 %v32, %v773
    %v778 = vsel %vm33, %v776, 0.0
    %779 = vadd.xlane.f32.xlu0 %v778
    %v780 = vpop.xlane.xlu0 %779
    %v781 = vsel %vm33, %v777, 0.0
    %782 = vadd.xlane.f32.xlu0 %v781
    %v783 = vpop.xlane.xlu0 %782
    %v784 = vmul.f32 %v780, %v40
    %v785 = vmul.f32 %v783, %v40
    %v786 = vsub.f32 %v776, %v784
    %v787 = vsub.f32 %v777, %v785
    %v788 = vmul.f32 %v786, %v786
    %v789 = vmul.f32 %v787, %v787
    %v790 = vsel %vm33, %v788, 0.0
    %791 = vadd.xlane.f32.xlu0 %v790
    %v792 = vpop.xlane.xlu0 %791
    %v793 = vsel %vm33, %v789, 0.0
    %794 = vadd.xlane.f32.xlu0 %v793
    %v795 = vpop.xlane.xlu0 %794
    %v796 = vmul.f32 %v792, %v40
    %v797 = vmul.f32 %v795, %v40
    %v798 = vadd.f32 %v796, 1e-05
    %v799 = vadd.f32 %v797, 1e-05
    %v800 = vrsqrt.pop %v798
    %v801 = vrsqrt.pop %v799
    %v802 = vmul.f32 %v786, %v800
    %v803 = vmul.f32 %v787, %v801
    %804 = vrot.lane.b32.xlu0 %v65, 64
    %v805 = vpop.permute.xlu0 %804
    %v807 = vmul.f32 %v802, %v805
    %v808 = vmul.f32 %v803, %v805
    %809 = vrot.lane.b32.xlu0 %v65, 32
    %v810 = vpop.permute.xlu0 %809
    %v812 = vadd.f32 %v807, %v810
    %v813 = vadd.f32 %v808, %v810
    %v814 = vpack.c.bf16 %v813, %v812
    %v816 = vlaneseq
    %v817 = vshrl.u32 %v816, 7
    %v818 = vsub.s32 0, %v817
    %v819 = vrot.slane %v30, %v818
    %v824 = vunpack.c.l.b16 %v23
    %v825 = vunpack.c.l.b16 %v24
    %v826 = vunpack.c.l.b16 %v25
    %v827 = vunpack.c.l.b16 %v26
    %v828 = vpack.c.b16 %v825, %v824
    %v829 = vpack.c.b16 %v827, %v826
    %832 = vrot.lane.b32.xlu0 %v819, 96
    %v833 = vpop.permute.xlu0 %832
    %v836 = vsel %vm33, %v814, 0
    %838 = vmatprep.subr.bf16.mxu0 0
    %839 = vmatpush1.bf16.msra.mxu0 0
    %840 = vmatprep.subr.bf16.mxu0 0
    %841 = vmatpush1.bf16.msra.mxu0 0
    %842 = vmatprep.subr.bf16.mxu0 0
    %843 = vmatpush1.bf16.msra.mxu0 0
    %844 = vmatprep.subr.bf16.mxu0 0
    %845 = vmatpush1.bf16.msra.mxu0 0
    %846 = vmatprep.subr.bf16.mxu0 0
    %847 = vmatpush1.bf16.msra.mxu0 0
    %848 = vmatprep.subr.bf16.mxu0 0
    %849 = vmatpush1.bf16.msra.mxu0 0
    %850 = vmatprep.subr.bf16.mxu0 0
    %851 = vmatpush1.bf16.msra.mxu0 %v829
    %852 = vmatprep.subr.bf16.mxu0 0
    %853 = vmatpush1.bf16.msra.mxu0 %v828
    %854 = vmatprep.subr.bf16.mxu0 0
    %855 = vmatpush2.bf16.msra.mxu0 0
    %856 = vmatprep.subr.bf16.mxu0 0
    %857 = vmatpush2.bf16.msra.mxu0 0
    %858 = vmatprep.subr.bf16.mxu0 0
    %859 = vmatpush2.bf16.msra.mxu0 0
    %860 = vmatprep.subr.bf16.mxu0 0
    %861 = vmatpush2.bf16.msra.mxu0 0
    %862 = vmatprep.subr.bf16.mxu0 0
    %863 = vmatpush2.bf16.msra.mxu0 0
    %864 = vmatprep.subr.bf16.mxu0 0
    %865 = vmatpush2.bf16.msra.mxu0 0
    %866 = vmatprep.subr.bf16.mxu0 0
    %867 = vmatpush2.bf16.msra.mxu0 0
    %868 = vmatprep.subr.bf16.mxu0 0
    %869 = vmatpush2.bf16.msra.mxu0 0
    %870 = vmatprep.mubr.bf16.mxu0 0
    %871 = vmatmul.mubr.bf16.gmra.mxu0 %v836
    %v872 = vpop.f32.mrf.mxu0
    %v873 = vadd.f32 %v833, %v872
    %v874 = vpop.f32.mrf.mxu0
    %v875 = vpop.f32.mrf.mxu0
    %v876 = vadd.f32 %v833, %v875
    %v877 = vpop.f32.mrf.mxu0
    %878 = vdwg.mxu0
    %v879 = vmax.f32 %v873, 0.0
    %v880 = vmax.f32 %v876, 0.0
    %v881 = vpack.c.bf16 %v880, %v879
    %v882 = vld [vmem:[%s2] sm:$0xf]
    %v883 = vld [vmem:[%s2 + $0x4] sm:$0xf]
    %v884 = vld [vmem:[%s2 + $0x8] sm:$0xf]
    %v885 = vld [vmem:[%s2 + $0xc] sm:$0xf]
    %v886 = vld [vmem:[%s2 + $0x10] sm:$0xf]
    %v887 = vld [vmem:[%s2 + $0x14] sm:$0xf]
    %v888 = vld [vmem:[%s2 + $0x18] sm:$0xf]
    %v889 = vld [vmem:[%s2 + $0x1c] sm:$0xf]
    %v898 = vunpack.c.l.b16 %v882
    %v899 = vunpack.c.l.b16 %v883
    %v900 = vunpack.c.l.b16 %v884
    %v901 = vunpack.c.l.b16 %v885
    %v902 = vunpack.c.l.b16 %v886
    %v903 = vunpack.c.l.b16 %v887
    %v904 = vunpack.c.l.b16 %v888
    %v905 = vunpack.c.l.b16 %v889
    %v906 = vpack.c.b16 %v899, %v898
    %v907 = vpack.c.b16 %v901, %v900
    %v908 = vpack.c.b16 %v903, %v902
    %v909 = vpack.c.b16 %v905, %v904
    %914 = vrot.lane.b32.xlu0 %v724, 96
    %v915 = vpop.permute.xlu0 %914
    %v918 = vsel %vm100, %v881, 0
    %920 = vmatprep.subr.bf16.mxu0 0
    %921 = vmatpush1.bf16.msra.mxu0 0
    %922 = vmatprep.subr.bf16.mxu0 0
    %923 = vmatpush1.bf16.msra.mxu0 0
    %924 = vmatprep.subr.bf16.mxu0 0
    %925 = vmatpush1.bf16.msra.mxu0 0
    %926 = vmatprep.subr.bf16.mxu0 0
    %927 = vmatpush1.bf16.msra.mxu0 0
    %928 = vmatprep.subr.bf16.mxu0 0
    %929 = vmatpush1.bf16.msra.mxu0 %v909
    %930 = vmatprep.subr.bf16.mxu0 0
    %931 = vmatpush1.bf16.msra.mxu0 %v908
    %932 = vmatprep.subr.bf16.mxu0 0
    %933 = vmatpush1.bf16.msra.mxu0 %v907
    %934 = vmatprep.subr.bf16.mxu0 0
    %935 = vmatpush1.bf16.msra.mxu0 %v906
    %936 = vmatprep.subr.bf16.mxu0 0
    %937 = vmatpush2.bf16.msra.mxu0 0
    %938 = vmatprep.subr.bf16.mxu0 0
    %939 = vmatpush2.bf16.msra.mxu0 0
    %940 = vmatprep.subr.bf16.mxu0 0
    %941 = vmatpush2.bf16.msra.mxu0 0
    %942 = vmatprep.subr.bf16.mxu0 0
    %943 = vmatpush2.bf16.msra.mxu0 0
    %944 = vmatprep.subr.bf16.mxu0 0
    %945 = vmatpush2.bf16.msra.mxu0 0
    %946 = vmatprep.subr.bf16.mxu0 0
    %947 = vmatpush2.bf16.msra.mxu0 0
    %948 = vmatprep.subr.bf16.mxu0 0
    %949 = vmatpush2.bf16.msra.mxu0 0
    %950 = vmatprep.subr.bf16.mxu0 0
    %951 = vmatpush2.bf16.msra.mxu0 0
    %952 = vmatprep.mubr.bf16.mxu0 0
    %953 = vmatmul.mubr.bf16.gmra.mxu0 %v918
    %v954 = vpop.f32.mrf.mxu0
    %v955 = vadd.f32 %v915, %v954
    %v956 = vpop.f32.mrf.mxu0
    %v957 = vpop.f32.mrf.mxu0
    %v958 = vadd.f32 %v915, %v957
    %v959 = vpop.f32.mrf.mxu0
    %960 = vdwg.mxu0
    %v961 = vadd.f32 %v776, %v955
    %v962 = vadd.f32 %v777, %v958
    %963 = vst.msk [vmem:[#allocation2] sm:$0xff] %vm33, %v961
    %964 = vst.msk [vmem:[#allocation2 + $0x8] sm:$0xff] %vm33, %v962
    // Predicated region
    $region18: #{tpu_custom_call.1} parent=1 // pred_check
      _
    $region19: #{tpu_custom_call.1} parent=1 // pred_check_branch
      %966 = sbr.rel (0) target = $region21
    $region20: #{tpu_custom_call.1} parent=1 // pred_region
      %s968 = ssub.s32 256, 256
      %969 = vsyncadd [#allocation3], %s968
      %s970 = sshll.u32 [#allocation2], 4
      %s971 = int_to_ptr.vmem [resolvable:$true] %s970
      %976 = dma.vmem_to_hbm [thread:$0]  %s971, 256, %s4, [#allocation3], 128, 128, 8
    $region21: #{tpu_custom_call.1} parent=1 // pred_fallthru
      _
    // Predicated region
    $region22: #{tpu_custom_call.1} parent=1 // pred_check
      _
    $region23: #{tpu_custom_call.1} parent=1 // pred_check_branch
      %978 = sbr.rel (0) target = $region25
    $region24: #{tpu_custom_call.1} parent=1 // pred_region
      %979 = dma.done [#allocation3], 256
    $region25: #{tpu_custom_call.1} parent=1 // pred_fallthru
      _
    %980 = vsyncpa [#allocation3], 1

</llo_original>
